<compile_context>
chip_gen: v5e
topology: v5e:2x2
jax: 0.10.0
libtpu: 0.0.40
codegen_flags: <defaults>
</compile_context>

<pallas_src>
import functools

import jax
import jax.numpy as jnp
from jax import lax
from jax.experimental import pallas as pl
from jax.experimental.pallas import tpu as pltpu


def _round_up(x: int, m: int) -> int:
    return (x + m - 1) // m * m


def _sobel_kernel(x_ref, up_ref, dn_ref, o_ref):
    # x_ref : (TH, Wp)  row tile of one channel
    # up_ref: (8, Wp)   8-row block ending just above this tile (clamped at top)
    # dn_ref: (8, Wp)   8-row block starting just below this tile (clamped at bottom)
    # o_ref : (TH, Wp)  output tile
    i = pl.program_id(1)
    n_row_tiles = pl.num_programs(1)

    x = x_ref[...]
    TH, Wp = x.shape

    # Halo rows; zero at the global top / bottom border.
    up_row = jnp.where(i == 0, 0.0, up_ref[pl.ds(7, 1), :])                 # (1, Wp)
    dn_row = jnp.where(i == n_row_tiles - 1, 0.0, dn_ref[pl.ds(0, 1), :])   # (1, Wp)

    row_idx = lax.broadcasted_iota(jnp.int32, (TH, Wp), 0)
    col_idx = lax.broadcasted_iota(jnp.int32, (TH, Wp), 1)

    # Row (sublane) shifts: xu[r] = x[r-1], xd[r] = x[r+1], halo-filled.
    xu = jnp.where(row_idx == 0, up_row, pltpu.roll(x, 1, axis=0))
    xd = jnp.where(row_idx == TH - 1, dn_row, pltpu.roll(x, TH - 1, axis=0))

    # Lane shifts with zero border (roll goes to the otherwise-idle XLU slot).
    def left(a):   # value at column c taken from column c-1 (zero at c == 0)
        return jnp.where(col_idx == 0, 0.0, pltpu.roll(a, 1, axis=1))

    def right(a):  # value at column c taken from column c+1 (zero at c == Wp-1)
        return jnp.where(col_idx == Wp - 1, 0.0, pltpu.roll(a, Wp - 1, axis=1))

    # Separable Sobel.
    t = xu + 2.0 * x + xd          # vertical [1, 2, 1] smoothing
    d = xd - xu                    # vertical [-1, 0, 1] difference
    gx = right(t) - left(t)        # Sobel-x
    gy = left(d) + 2.0 * d + right(d)  # Sobel-y

    o_ref[...] = jnp.sqrt(gx * gx + gy * gy)


@functools.partial(jax.jit, static_argnames=("block_bytes",))
def image_gradient(img: jax.Array, *, block_bytes: int = 1 << 20) -> jax.Array:
    """img: (C, H, W) -> (C, H, W) Sobel gradient magnitude (float32)."""
    C, H, W = img.shape
    x = img.astype(jnp.float32)

    # Lane-dense last dim (multiple of 128) and 8-aligned rows.
    Wp = _round_up(W, 128)
    H8 = _round_up(H, 8)
    # Row-tile height: ~block_bytes per f32 input block, multiple of 8 sublanes.
    th = max(8, (block_bytes // (4 * Wp)) // 8 * 8)
    TH = min(th, H8)
    Hp = _round_up(H, TH)

    if (Hp, Wp) != (H, W):
        # Fallback only for unaligned shapes; bottom/right zero pad (matches the
        # conv zero padding semantics), cropped after the kernel.
        x = jnp.pad(x, ((0, 0), (0, Hp - H), (0, Wp - W)))

    n_row_tiles = Hp // TH
    th8 = TH // 8          # row tile height in units of 8-row blocks
    n8 = Hp // 8           # number of 8-row blocks along H

    center_spec = pl.BlockSpec((None, TH, Wp), lambda c, i: (c, i, 0))
    up_spec = pl.BlockSpec(
        (None, 8, Wp), lambda c, i: (c, jnp.maximum(i * th8 - 1, 0), 0))
    dn_spec = pl.BlockSpec(
        (None, 8, Wp), lambda c, i: (c, jnp.minimum((i + 1) * th8, n8 - 1), 0))
    out_spec = pl.BlockSpec((None, TH, Wp), lambda c, i: (c, i, 0))

    out = pl.pallas_call(
        _sobel_kernel,
        out_shape=jax.ShapeDtypeStruct((C, Hp, Wp), jnp.float32),
        grid=(C, n_row_tiles),
        in_specs=[center_spec, up_spec, dn_spec],
        out_specs=out_spec,
        compiler_params=pltpu.CompilerParams(
            dimension_semantics=("parallel", "parallel"),
            vmem_limit_bytes=32 * 1024 * 1024,
        ),
    )(x, x, x)

    if (Hp, Wp) != (H, W):
        out = out[:, :H, :W]
    return out


def _reference(img: jnp.ndarray) -> jnp.ndarray:
    """Pure-JAX reference matching torch.nn.functional.conv2d semantics."""
    sobel_x = jnp.array([[-1.0, 0.0, 1.0],
                         [-2.0, 0.0, 2.0],
                         [-1.0, 0.0, 1.0]], jnp.float32)
    sobel_y = jnp.array([[-1.0, -2.0, -1.0],
                         [0.0, 0.0, 0.0],
                         [1.0, 2.0, 1.0]], jnp.float32)
    C = img.shape[0]
    x = img.astype(jnp.float32)[None]  # (1, C, H, W)
    wx = jnp.broadcast_to(sobel_x[None, None], (C, 1, 3, 3))
    wy = jnp.broadcast_to(sobel_y[None, None], (C, 1, 3, 3))
    gx = lax.conv_general_dilated(
        x, wx, window_strides=(1, 1), padding=((1, 1), (1, 1)),
        feature_group_count=C, dimension_numbers=("NCHW", "OIHW", "NCHW"),
        precision=lax.Precision.HIGHEST)[0]
    gy = lax.conv_general_dilated(
        x, wy, window_strides=(1, 1), padding=((1, 1), (1, 1)),
        feature_group_count=C, dimension_numbers=("NCHW", "OIHW", "NCHW"),
        precision=lax.Precision.HIGHEST)[0]
    return jnp.sqrt(gx ** 2 + gy ** 2)


if __name__ == "__main__":
    key = jax.random.PRNGKey(0)
    k1, k2 = jax.random.split(key)

    # Primary case: lane/sublane-aligned small image (no wrapper pad pass).
    img = jax.random.normal(k1, (4, 16, 128), dtype=jnp.float32)
    out = image_gradient(img)
    jax.block_until_ready(out)
    ref = _reference(img)
    assert out.shape == img.shape
    assert jnp.allclose(out, ref, atol=1e-4, rtol=1e-4), "mismatch (aligned case)"

    # Unaligned fallback path (wrapper pad + crop, in-kernel border masking).
    img2 = jax.random.normal(k2, (3, 17, 50), dtype=jnp.float32)
    out2 = image_gradient(img2)
    jax.block_until_ready(out2)
    ref2 = _reference(img2)
    assert out2.shape == img2.shape
    assert jnp.allclose(out2, ref2, atol=1e-4, rtol=1e-4), "mismatch (unaligned case)"

    print("KERNEL_OK")
</pallas_src>

<mosaic_0001>
module attributes {stable_mosaic.version = 11 : i64} {
  func.func @_sobel_kernel(%arg0: i32, %arg1: i32, %arg2: memref<1x16x128xf32, #tpu.memory_space<vmem>>, %arg3: memref<1x8x128xf32, #tpu.memory_space<vmem>>, %arg4: memref<1x8x128xf32, #tpu.memory_space<vmem>>, %arg5: memref<1x16x128xf32, #tpu.memory_space<vmem>>) attributes {dimension_semantics = [#tpu.dimension_semantics<parallel>, #tpu.dimension_semantics<parallel>], iteration_bounds = array<i64: 4, 1>, scalar_prefetch = 0 : i64, scratch_operands = 0 : i64, tpu.core_type = #tpu.core_type<tc>, window_params = [{transform_indices = @transform_0, window_bounds = array<i64: 1, 16, 128>}, {transform_indices = @transform_1, window_bounds = array<i64: 1, 8, 128>}, {transform_indices = @transform_2, window_bounds = array<i64: 1, 8, 128>}, {transform_indices = @transform_3, window_bounds = array<i64: 1, 16, 128>}]} {
    %c0 = arith.constant 0 : index
    %c0_0 = arith.constant 0 : index
    %c0_1 = arith.constant 0 : index
    %0 = vector.load %arg2[%c0, %c0_0, %c0_1] : memref<1x16x128xf32, #tpu.memory_space<vmem>>, vector<1x16x128xf32>
    %1 = vector.shape_cast %0 : vector<1x16x128xf32> to vector<16x128xf32>
    %c0_i32 = arith.constant 0 : i32
    %2 = arith.cmpi eq, %arg1, %c0_i32 : i32
    %c0_2 = arith.constant 0 : index
    %c7 = arith.constant 7 : index
    %c0_3 = arith.constant 0 : index
    %3 = vector.load %arg3[%c0_2, %c7, %c0_3] : memref<1x8x128xf32, #tpu.memory_space<vmem>>, vector<1x1x128xf32>
    %4 = vector.shape_cast %3 : vector<1x1x128xf32> to vector<1x128xf32>
    %cst = arith.constant 0.000000e+00 : f32
    %5 = vector.broadcast %cst : f32 to vector<1x128xf32>
    %6 = arith.select %2, %5, %4 : vector<1x128xf32>
    %c0_i32_4 = arith.constant 0 : i32
    %7 = arith.cmpi eq, %arg1, %c0_i32_4 : i32
    %c0_5 = arith.constant 0 : index
    %c0_6 = arith.constant 0 : index
    %c0_7 = arith.constant 0 : index
    %8 = vector.load %arg4[%c0_5, %c0_6, %c0_7] : memref<1x8x128xf32, #tpu.memory_space<vmem>>, vector<1x1x128xf32>
    %9 = vector.shape_cast %8 : vector<1x1x128xf32> to vector<1x128xf32>
    %cst_8 = arith.constant 0.000000e+00 : f32
    %10 = vector.broadcast %cst_8 : f32 to vector<1x128xf32>
    %11 = arith.select %7, %10, %9 : vector<1x128xf32>
    %12 = tpu.iota {dimensions = array<i32: 0>} : vector<16x128xi32>
    %13 = tpu.iota {dimensions = array<i32: 1>} : vector<16x128xi32>
    %c0_i32_9 = arith.constant 0 : i32
    %14 = vector.broadcast %c0_i32_9 : i32 to vector<16x128xi32>
    %15 = arith.cmpi eq, %12, %14 : vector<16x128xi32>
    %c1_i32 = arith.constant 1 : i32
    %16 = tpu.dynamic_rotate %1 by %c1_i32 dim 0 : vector<16x128xf32>, i32 -> vector<16x128xf32>
    %17 = vector.shape_cast %6 : vector<1x128xf32> to vector<1x128xf32>
    %18 = vector.broadcast %17 : vector<1x128xf32> to vector<16x128xf32>
    %19 = arith.select %15, %18, %16 : vector<16x128xi1>, vector<16x128xf32>
    %c15_i32 = arith.constant 15 : i32
    %20 = vector.broadcast %c15_i32 : i32 to vector<16x128xi32>
    %21 = arith.cmpi eq, %12, %20 : vector<16x128xi32>
    %c15_i32_10 = arith.constant 15 : i32
    %22 = tpu.dynamic_rotate %1 by %c15_i32_10 dim 0 : vector<16x128xf32>, i32 -> vector<16x128xf32>
    %23 = vector.shape_cast %11 : vector<1x128xf32> to vector<1x128xf32>
    %24 = vector.broadcast %23 : vector<1x128xf32> to vector<16x128xf32>
    %25 = arith.select %21, %24, %22 : vector<16x128xi1>, vector<16x128xf32>
    %cst_11 = arith.constant 2.000000e+00 : f32
    %26 = vector.broadcast %cst_11 : f32 to vector<16x128xf32>
    %27 = arith.mulf %26, %1 : vector<16x128xf32>
    %28 = arith.addf %19, %27 : vector<16x128xf32>
    %29 = arith.addf %28, %25 : vector<16x128xf32>
    %30 = arith.subf %25, %19 : vector<16x128xf32>
    %c127_i32 = arith.constant 127 : i32
    %31 = vector.broadcast %c127_i32 : i32 to vector<16x128xi32>
    %32 = arith.cmpi eq, %13, %31 : vector<16x128xi32>
    %c127_i32_12 = arith.constant 127 : i32
    %33 = tpu.dynamic_rotate %29 by %c127_i32_12 dim 1 : vector<16x128xf32>, i32 -> vector<16x128xf32>
    %cst_13 = arith.constant 0.000000e+00 : f32
    %34 = vector.broadcast %cst_13 : f32 to vector<16x128xf32>
    %35 = arith.select %32, %34, %33 : vector<16x128xi1>, vector<16x128xf32>
    %c0_i32_14 = arith.constant 0 : i32
    %36 = vector.broadcast %c0_i32_14 : i32 to vector<16x128xi32>
    %37 = arith.cmpi eq, %13, %36 : vector<16x128xi32>
    %c1_i32_15 = arith.constant 1 : i32
    %38 = tpu.dynamic_rotate %29 by %c1_i32_15 dim 1 : vector<16x128xf32>, i32 -> vector<16x128xf32>
    %cst_16 = arith.constant 0.000000e+00 : f32
    %39 = vector.broadcast %cst_16 : f32 to vector<16x128xf32>
    %40 = arith.select %37, %39, %38 : vector<16x128xi1>, vector<16x128xf32>
    %41 = arith.subf %35, %40 : vector<16x128xf32>
    %c0_i32_17 = arith.constant 0 : i32
    %42 = vector.broadcast %c0_i32_17 : i32 to vector<16x128xi32>
    %43 = arith.cmpi eq, %13, %42 : vector<16x128xi32>
    %c1_i32_18 = arith.constant 1 : i32
    %44 = tpu.dynamic_rotate %30 by %c1_i32_18 dim 1 : vector<16x128xf32>, i32 -> vector<16x128xf32>
    %cst_19 = arith.constant 0.000000e+00 : f32
    %45 = vector.broadcast %cst_19 : f32 to vector<16x128xf32>
    %46 = arith.select %43, %45, %44 : vector<16x128xi1>, vector<16x128xf32>
    %cst_20 = arith.constant 2.000000e+00 : f32
    %47 = vector.broadcast %cst_20 : f32 to vector<16x128xf32>
    %48 = arith.mulf %47, %30 : vector<16x128xf32>
    %49 = arith.addf %46, %48 : vector<16x128xf32>
    %c127_i32_21 = arith.constant 127 : i32
    %50 = vector.broadcast %c127_i32_21 : i32 to vector<16x128xi32>
    %51 = arith.cmpi eq, %13, %50 : vector<16x128xi32>
    %c127_i32_22 = arith.constant 127 : i32
    %52 = tpu.dynamic_rotate %30 by %c127_i32_22 dim 1 : vector<16x128xf32>, i32 -> vector<16x128xf32>
    %cst_23 = arith.constant 0.000000e+00 : f32
    %53 = vector.broadcast %cst_23 : f32 to vector<16x128xf32>
    %54 = arith.select %51, %53, %52 : vector<16x128xi1>, vector<16x128xf32>
    %55 = arith.addf %49, %54 : vector<16x128xf32>
    %56 = arith.mulf %41, %41 : vector<16x128xf32>
    %57 = arith.mulf %55, %55 : vector<16x128xf32>
    %58 = arith.addf %56, %57 : vector<16x128xf32>
    %59 = math.sqrt %58 : vector<16x128xf32>
    %c0_24 = arith.constant 0 : index
    %c0_25 = arith.constant 0 : index
    %c0_26 = arith.constant 0 : index
    %60 = vector.load %arg5[%c0_24, %c0_25, %c0_26] : memref<1x16x128xf32, #tpu.memory_space<vmem>>, vector<1x16x128xf32>
    %61 = vector.shape_cast %60 : vector<1x16x128xf32> to vector<16x128xf32>
    %62 = vector.shape_cast %59 : vector<16x128xf32> to vector<1x16x128xf32>
    tpu.vector_store %arg5[%c0_24, %c0_25, %c0_26], %62 {strides = array<i32>} : memref<1x16x128xf32, #tpu.memory_space<vmem>>, vector<1x16x128xf32>,
    return
  }
  func.func @transform_0(%arg0: i32, %arg1: i32) -> (i32, i32, i32) {
    %c0_i32 = arith.constant 0 : i32
    %c0_i32_0 = arith.constant 0 : i32
    return %arg0, %arg1, %c0_i32 : i32, i32, i32
  }
  func.func @transform_1(%arg0: i32, %arg1: i32) -> (i32, i32, i32) {
    %c2_i32 = arith.constant 2 : i32
    %0 = arith.muli %arg1, %c2_i32 : i32
    %c1_i32 = arith.constant 1 : i32
    %1 = arith.subi %0, %c1_i32 : i32
    %c0_i32 = arith.constant 0 : i32
    %2 = arith.maxsi %1, %c0_i32 : i32
    %c0_i32_0 = arith.constant 0 : i32
    %c0_i32_1 = arith.constant 0 : i32
    return %arg0, %2, %c0_i32_0 : i32, i32, i32
  }
  func.func @transform_2(%arg0: i32, %arg1: i32) -> (i32, i32, i32) {
    %c1_i32 = arith.constant 1 : i32
    %0 = arith.addi %arg1, %c1_i32 : i32
    %c2_i32 = arith.constant 2 : i32
    %1 = arith.muli %0, %c2_i32 : i32
    %c1_i32_0 = arith.constant 1 : i32
    %2 = arith.minsi %1, %c1_i32_0 : i32
    %c0_i32 = arith.constant 0 : i32
    %c0_i32_1 = arith.constant 0 : i32
    return %arg0, %2, %c0_i32 : i32, i32, i32
  }
  func.func @transform_3(%arg0: i32, %arg1: i32) -> (i32, i32, i32) {
    %c0_i32 = arith.constant 0 : i32
    %c0_i32_0 = arith.constant 0 : i32
    return %arg0, %arg1, %c0_i32 : i32, i32, i32
  }
}

</mosaic_0001>

<llo_original>
// kernel: image_gradient.1
$region0: #{image_gradient.1}
  #allocation0 [shape = 'u32[]', space=smem, size = 0x4, offset = 0x4, fixed_abs, tag = 'smem constant byte address 0x4 - core index']
  #allocation1 [shape = 'u32[72,128]{1,0:T(1,128)}', space=vmem, size = 0x9000, scoped, tag = 'internal scratch']
  %s0 = inlined_call_operand.hbm [shape: f32[4,16,128], index: 0, kind: input, shape index: {}, may-alias: {0,1,2}]
  %s1 = inlined_call_operand.hbm [shape: f32[4,16,128], index: 1, kind: input, shape index: {}, may-alias: {0,1,2}]
  %s2 = inlined_call_operand.hbm [shape: f32[4,16,128], index: 2, kind: input, shape index: {}, may-alias: {0,1,2}]
  %s3 = inlined_call_operand.hbm [shape: f32[4,16,128], index: 3, kind: output, shape index: {}]
  %s4 = sld [smem:[#allocation0]]
  $region57: #{image_gradient.1} parent=0
    _
  %s6 = ssub.s32 1, %s4
  %s7 = scalar_select 0, %s6, %s4
  $region1: #{image_gradient.1} parent=0
    #allocation2 [shape = 'u8[16384]{0}', space=vmem, size = 0x4000, scoped, tag = 'input window, operand 0']
    #allocation3 [shape = 's32[2]{0}', space=sflag, size = 0x8, scoped, tag = 'scoped memory for image_gradient.1']
    #allocation4 [shape = 's32[2]{0}', space=sflag, size = 0x8, scoped, tag = 'scoped memory for image_gradient.1']
    #allocation5 [shape = 'u8[8192]{0}', space=vmem, size = 0x2000, scoped, tag = 'input window, operand 1']
    #allocation6 [shape = 's32[2]{0}', space=sflag, size = 0x8, scoped, tag = 'scoped memory for image_gradient.1']
    #allocation7 [shape = 'u8[8192]{0}', space=vmem, size = 0x2000, scoped, tag = 'input window, operand 2']
    #allocation8 [shape = 'u8[16384]{0}', space=vmem, size = 0x4000, scoped, tag = 'output window, operand 0']
    %8 = vsyncpa [#allocation3], 0
    %s9 = scalar_lea.sflag [#allocation3], 1
    %10 = vsyncpa %s9, 0
    %11 = vsyncpa [#allocation6], 0
    %s12 = scalar_lea.sflag [#allocation6], 1
    %13 = vsyncpa %s12, 0
    %14 = vsyncpa [#allocation4], 0
    %s15 = scalar_lea.sflag [#allocation4], 1
    %16 = vsyncpa %s15, 0
    loop: start=0, step=1, limit=6
    $region2: #{image_gradient.1} parent=1 // loop_pre_header
      _
    $region3: #{image_gradient.1} parent=1 // loop_header
      %s18 = sphi 0, %s22
      %p19 = scmp.ge.s32.totalorder %s18, 6
      %s25 = sphi 0, %s37
      %s26 = sphi 0, %s33
      %s27 = sphi 0, %s25
      %s28 = sphi 0, %s26
      %s29 = sphi 0, %s27
      %s30 = sphi 0, %s28
      %s42 = sphi 0, %s44
      %s45 = sphi 0, %s42
      %s46 = sphi 0, %s45
      %s62 = sphi 0, %s46
      %s78 = sphi 0, %s80
      %s81 = sphi 0, %s78
      %s82 = sphi 0, %s81
      %s98 = sphi 0, %s82
      %s114 = sphi 0, %s116
      %s117 = sphi 0, %s114
      %s118 = sphi 0, %s117
      %s134 = sphi 0, %s118
      %s142 = sphi 0, %s144
      %s145 = sphi 0, %s142
      %s146 = sphi 0, %s145
      %s162 = sphi 0, %s146
    $region4: #{image_gradient.1} parent=1 // loop_header_branch
      %21 = sbr.rel (%p19) target = $region8
    $region5: #{image_gradient.1} parent=1 // loop_body
      %s23 = ssub.s32 %s18, 1
      %s24 = ssub.s32 %s18, 2
      %s31 = sadd.s32 1, %s26
      %p32 = scmp.ge.s32.totalorder %s31, 1
      %s33 = scalar_select %p32, 0, %s31
      %s34 = sadd.s32 1, %s25
      %s35 = scalar_select %p32, %s34, %s25
      %p36 = scmp.ge.s32.totalorder %s35, 4
      %s37 = scalar_select %p36, 0, %s35
      %s38 = ssub.s32 %s25, %s37
      %s39 = ssub.s32 %s26, %s33
      %s40 = sor.u32 %s38, %s39
      %p41 = scmp.eq.s32.totalorder %s40, 0
      %s43 = sadd.s32 %s42, 1
      %s44 = scalar_select %p41, %s42, %s43
      %p47 = pneg %p41
      %p48 = scmp.eq.s32.totalorder %s18, 3
      %p49 = por %p47, %p48
      %p50 = scmp.ne.s32.totalorder %s42, %s45
      %p51 = scmp.eq.s32.totalorder %s18, 0
      %p52 = por %p50, %p51
      %p53 = scmp.ne.s32.totalorder %s42, %s45
      %p54 = scmp.eq.s32.totalorder %s23, 3
      %p55 = por %p53, %p54
      %p56 = scmp.ne.s32.totalorder %s45, %s46
      %p57 = scmp.eq.s32.totalorder %s23, 0
      %p58 = por %p56, %p57
      %p59 = scmp.ne.s32.totalorder %s45, %s46
      %p60 = scmp.eq.s32.totalorder %s24, 3
      %p61 = por %p59, %p60
      %p63 = scmp.ne.s32.totalorder %s46, %s62
      %p64 = scmp.eq.s32.totalorder %s24, 0
      %p65 = por %p63, %p64
      %s66 = smul.u32 %s26, 2
      %s67 = ssub.s32 %s66, 1
      %p68 = scmp.gt.s32.totalorder %s67, 0
      %s69 = scalar_select %p68, %s67, 0
      %s70 = smul.u32 %s33, 2
      %s71 = ssub.s32 %s70, 1
      %p72 = scmp.gt.s32.totalorder %s71, 0
      %s73 = scalar_select %p72, %s71, 0
      %s74 = ssub.s32 %s25, %s37
      %s75 = ssub.s32 %s69, %s73
      %s76 = sor.u32 %s74, %s75
      %p77 = scmp.eq.s32.totalorder %s76, 0
      %s79 = sadd.s32 %s78, 1
      %s80 = scalar_select %p77, %s78, %s79
      %p83 = pneg %p77
      %p84 = scmp.eq.s32.totalorder %s18, 3
      %p85 = por %p83, %p84
      %p86 = scmp.ne.s32.totalorder %s78, %s81
      %p87 = scmp.eq.s32.totalorder %s18, 0
      %p88 = por %p86, %p87
      %p89 = scmp.ne.s32.totalorder %s78, %s81
      %p90 = scmp.eq.s32.totalorder %s23, 3
      %p91 = por %p89, %p90
      %p92 = scmp.ne.s32.totalorder %s81, %s82
      %p93 = scmp.eq.s32.totalorder %s23, 0
      %p94 = por %p92, %p93
      %p95 = scmp.ne.s32.totalorder %s81, %s82
      %p96 = scmp.eq.s32.totalorder %s24, 3
      %p97 = por %p95, %p96
      %p99 = scmp.ne.s32.totalorder %s82, %s98
      %p100 = scmp.eq.s32.totalorder %s24, 0
      %p101 = por %p99, %p100
      %s102 = sadd.s32 %s26, 1
      %s103 = smul.u32 %s102, 2
      %p104 = scmp.lt.s32.totalorder %s103, 1
      %s105 = scalar_select %p104, %s103, 1
      %s106 = sadd.s32 %s33, 1
      %s107 = smul.u32 %s106, 2
      %p108 = scmp.lt.s32.totalorder %s107, 1
      %s109 = scalar_select %p108, %s107, 1
      %s110 = ssub.s32 %s25, %s37
      %s111 = ssub.s32 %s105, %s109
      %s112 = sor.u32 %s110, %s111
      %p113 = scmp.eq.s32.totalorder %s112, 0
      %s115 = sadd.s32 %s114, 1
      %s116 = scalar_select %p113, %s114, %s115
      %p119 = pneg %p113
      %p120 = scmp.eq.s32.totalorder %s18, 3
      %p121 = por %p119, %p120
      %p122 = scmp.ne.s32.totalorder %s114, %s117
      %p123 = scmp.eq.s32.totalorder %s18, 0
      %p124 = por %p122, %p123
      %p125 = scmp.ne.s32.totalorder %s114, %s117
      %p126 = scmp.eq.s32.totalorder %s23, 3
      %p127 = por %p125, %p126
      %p128 = scmp.ne.s32.totalorder %s117, %s118
      %p129 = scmp.eq.s32.totalorder %s23, 0
      %p130 = por %p128, %p129
      %p131 = scmp.ne.s32.totalorder %s117, %s118
      %p132 = scmp.eq.s32.totalorder %s24, 3
      %p133 = por %p131, %p132
      %p135 = scmp.ne.s32.totalorder %s118, %s134
      %p136 = scmp.eq.s32.totalorder %s24, 0
      %p137 = por %p135, %p136
      %s138 = ssub.s32 %s25, %s37
      %s139 = ssub.s32 %s26, %s33
      %s140 = sor.u32 %s138, %s139
      %p141 = scmp.eq.s32.totalorder %s140, 0
      %s143 = sadd.s32 %s142, 1
      %s144 = scalar_select %p141, %s142, %s143
      %p147 = pneg %p141
      %p148 = scmp.eq.s32.totalorder %s18, 3
      %p149 = por %p147, %p148
      %p150 = scmp.ne.s32.totalorder %s142, %s145
      %p151 = scmp.eq.s32.totalorder %s18, 0
      %p152 = por %p150, %p151
      %p153 = scmp.ne.s32.totalorder %s142, %s145
      %p154 = scmp.eq.s32.totalorder %s23, 3
      %p155 = por %p153, %p154
      %p156 = scmp.ne.s32.totalorder %s145, %s146
      %p157 = scmp.eq.s32.totalorder %s23, 0
      %p158 = por %p156, %p157
      %p159 = scmp.ne.s32.totalorder %s145, %s146
      %p160 = scmp.eq.s32.totalorder %s24, 3
      %p161 = por %p159, %p160
      %p163 = scmp.ne.s32.totalorder %s146, %s162
      %p164 = scmp.eq.s32.totalorder %s24, 0
      %p165 = por %p163, %p164
      %p166 = scmp.le.s32.totalorder 1, %s18
      %p167 = scmp.lt.s32.totalorder %s18, 5
      %p168 = pnand %p166, %p167
      %p169 = pneg %p168
      // Predicated region
      $region9: #{image_gradient.1} parent=5 // pred_check
        _
      $region10: #{image_gradient.1} parent=5 // pred_check_branch
        %171 = sbr.rel (%p168) target = $region12
      $region11: #{image_gradient.1} parent=5 // pred_region
        %s172 = ssub.s32 %s18, 1
      $region12: #{image_gradient.1} parent=5 // pred_fallthru
        _
      %p173 = scmp.lt.s32.totalorder %s18, 4
      // Predicated region
      $region13: #{image_gradient.1} parent=5 // pred_check
        %p174 = pneg %p173
      $region14: #{image_gradient.1} parent=5 // pred_check_branch
        %176 = sbr.rel (%p174) target = $region16
      $region15: #{image_gradient.1} parent=5 // pred_region
        // Predicated region
        $region17: #{image_gradient.1} parent=15 // pred_check
          %p177 = pneg %p52
        $region18: #{image_gradient.1} parent=15 // pred_check_branch
          %179 = sbr.rel (%p177) target = $region20
        $region19: #{image_gradient.1} parent=15 // pred_region
          %s180 = sand.u32 %s42, 1
          %s181 = scalar_lea.sflag [#allocation3], %s180
          %s182 = sand.u32 %s42, 1
          %s183 = smul.addr %s182, 16
          %s184 = scalar_lea.vmem [#allocation2], %s183
          %s185 = smul.u32 2, %s26
          %187 = vsyncadd %s181, 0
          %s188 = smul.addr %s25, 2
          %s189 = sadd.s32 %s185, %s188
          %s190 = smul.addr %s189, 8
          %s191 = scalar_lea.hbm %s0, %s190
          %s192 = sshll.u32 %s191, 4
          %s193 = int_to_ptr.hbm [resolvable:$true] %s192
          %s194 = sshll.u32 %s184, 4
          %s195 = int_to_ptr.vmem [resolvable:$true] %s194
          %200 = dma.hbm_to_vmem [thread:$0]  %s193, 256, %s195, %s181, 128, 128, 8
        $region20: #{image_gradient.1} parent=15 // pred_fallthru
          _
        // Predicated region
        $region21: #{image_gradient.1} parent=15 // pred_check
          %p201 = pneg %p88
        $region22: #{image_gradient.1} parent=15 // pred_check_branch
          %203 = sbr.rel (%p201) target = $region24
        $region23: #{image_gradient.1} parent=15 // pred_region
          %s204 = sand.u32 %s18, 1
          %s205 = scalar_lea.sflag [#allocation6], %s204
          %s206 = sand.u32 %s78, 1
          %s207 = smul.addr %s206, 8
          %s208 = scalar_lea.vmem [#allocation5], %s207
          %s209 = smul.u32 %s26, 2
          %s210 = ssub.s32 %s209, 1
          %p211 = scmp.gt.s32.totalorder %s210, 0
          %s212 = scalar_select %p211, %s210, 0
          %214 = vsyncadd %s205, 0
          %s215 = smul.addr %s25, 2
          %s216 = sadd.s32 %s212, %s215
          %s217 = smul.addr %s216, 8
          %s218 = scalar_lea.hbm %s1, %s217
          %s220 = sshll.u32 %s218, 4
          %s221 = int_to_ptr.hbm [resolvable:$true] %s220
          %s222 = sshll.u32 %s208, 4
          %s223 = int_to_ptr.vmem [resolvable:$true] %s222
          %225 = dma.hbm_to_vmem [thread:$0]  %s221, 128, %s223, %s205
        $region24: #{image_gradient.1} parent=15 // pred_fallthru
          _
        // Predicated region
        $region25: #{image_gradient.1} parent=15 // pred_check
          %p226 = pneg %p124
        $region26: #{image_gradient.1} parent=15 // pred_check_branch
          %228 = sbr.rel (%p226) target = $region28
        $region27: #{image_gradient.1} parent=15 // pred_region
          %s229 = sand.u32 %s18, 1
          %s230 = scalar_lea.sflag [#allocation6], %s229
          %s231 = sand.u32 %s114, 1
          %s232 = smul.addr %s231, 8
          %s233 = scalar_lea.vmem [#allocation7], %s232
          %s234 = sadd.s32 %s26, 1
          %s235 = smul.u32 %s234, 2
          %p236 = scmp.lt.s32.totalorder %s235, 1
          %s237 = scalar_select %p236, %s235, 1
          %239 = vsyncadd %s230, 0
          %s240 = smul.addr %s25, 2
          %s241 = sadd.s32 %s237, %s240
          %s242 = smul.addr %s241, 8
          %s243 = scalar_lea.hbm %s2, %s242
          %s245 = sshll.u32 %s243, 4
          %s246 = int_to_ptr.hbm [resolvable:$true] %s245
          %s247 = sshll.u32 %s233, 4
          %s248 = int_to_ptr.vmem [resolvable:$true] %s247
          %250 = dma.hbm_to_vmem [thread:$0]  %s246, 128, %s248, %s230
        $region28: #{image_gradient.1} parent=15 // pred_fallthru
          _
      $region16: #{image_gradient.1} parent=5 // pred_fallthru
        _
      %p251 = scmp.le.s32.totalorder 1, %s18
      %p252 = scmp.lt.s32.totalorder %s18, 5
      %p253 = pnand %p251, %p252
      %p254 = pneg %p253
      // Predicated region
      $region29: #{image_gradient.1} parent=5 // pred_check
        _
      $region30: #{image_gradient.1} parent=5 // pred_check_branch
        %256 = sbr.rel (%p253) target = $region32
      $region31: #{image_gradient.1} parent=5 // pred_region
        %s257 = ssub.s32 %s18, 1
        %s258 = sand.u32 %s45, 1
        %s259 = scalar_lea.sflag [#allocation3], %s258
        %s260 = sand.u32 %s45, 1
        %s261 = smul.addr %s260, 16
        %s262 = scalar_lea.vmem [#allocation2], %s261
        // Predicated region
        $region33: #{image_gradient.1} parent=31 // pred_check
          %p263 = pneg %p58
        $region34: #{image_gradient.1} parent=31 // pred_check_branch
          %265 = sbr.rel (%p263) target = $region36
        $region35: #{image_gradient.1} parent=31 // pred_region
          %267 = dma.done %s259, 256
        $region36: #{image_gradient.1} parent=31 // pred_fallthru
          _
        %s268 = sand.u32 %s23, 1
        %s269 = scalar_lea.sflag [#allocation6], %s268
        %s270 = sand.u32 %s81, 1
        %s271 = smul.addr %s270, 8
        %s272 = scalar_lea.vmem [#allocation5], %s271
        // Predicated region
        $region37: #{image_gradient.1} parent=31 // pred_check
          %p273 = pneg %p94
        $region38: #{image_gradient.1} parent=31 // pred_check_branch
          %275 = sbr.rel (%p273) target = $region40
        $region39: #{image_gradient.1} parent=31 // pred_region
          %277 = dma.done %s269, 128
        $region40: #{image_gradient.1} parent=31 // pred_fallthru
          _
        %s278 = sand.u32 %s23, 1
        %s279 = scalar_lea.sflag [#allocation6], %s278
        %s280 = sand.u32 %s117, 1
        %s281 = smul.addr %s280, 8
        %s282 = scalar_lea.vmem [#allocation7], %s281
        // Predicated region
        $region41: #{image_gradient.1} parent=31 // pred_check
          %p283 = pneg %p130
        $region42: #{image_gradient.1} parent=31 // pred_check_branch
          %285 = sbr.rel (%p283) target = $region44
        $region43: #{image_gradient.1} parent=31 // pred_region
          %287 = dma.done %s279, 128
        $region44: #{image_gradient.1} parent=31 // pred_fallthru
          _
        %s288 = sand.u32 %s45, 1
        %s289 = scalar_lea.sflag [#allocation3], %s288
        %s290 = sand.u32 %s45, 1
        %s291 = smul.addr %s290, 16
        %s292 = scalar_lea.vmem [#allocation2], %s291
        %p293 = pneg %p58
        %p294 = pneg %p55
        %s295 = sand.u32 %s23, 1
        %s296 = scalar_lea.sflag [#allocation6], %s295
        %s297 = sand.u32 %s81, 1
        %s298 = smul.addr %s297, 8
        %s299 = scalar_lea.vmem [#allocation5], %s298
        %p300 = pneg %p94
        %p301 = pneg %p91
        %s302 = sand.u32 %s23, 1
        %s303 = scalar_lea.sflag [#allocation6], %s302
        %s304 = sand.u32 %s117, 1
        %s305 = smul.addr %s304, 8
        %s306 = scalar_lea.vmem [#allocation7], %s305
        %p307 = pneg %p130
        %p308 = pneg %p127
        %p309 = pneg %p158
        %p310 = pneg %p155
        %s311 = sand.u32 %s145, 1
        %s312 = scalar_lea.sflag [#allocation4], %s311
        %s313 = sand.u32 %s145, 1
        %s314 = smul.addr %s313, 16
        %s315 = scalar_lea.vmem [#allocation8], %s314
        %s316 = smul.u32 2, %s28
        %s317 = smul.u32 %s28, 2
        %s318 = ssub.s32 %s317, 1
        %p319 = scmp.gt.s32.totalorder %s318, 0
        %s320 = scalar_select %p319, %s318, 0
        %s321 = sadd.s32 %s28, 1
        %s322 = smul.u32 %s321, 2
        %p323 = scmp.lt.s32.totalorder %s322, 1
        %s324 = scalar_select %p323, %s322, 1
        %s325 = smul.u32 2, %s28
        %v326 = vld [vmem:[%s262] sm:$0xff]
        %v327 = vld [vmem:[%s262 + $0x8] sm:$0xff]
        %p328 = scmp.eq.s32.totalorder %s28, 0
        %v329 = vld [vmem:[%s272 + $0x7] sm:$0x1]
        %s330 = scalar_select %p328, 1, 0
        %v331 = vstv %s330
        %vm332 = vcmp.eq.s32.totalorder %v331, 1
        %v333 = vsel %vm332, 0.0, %v329
        %v334 = vld [vmem:[%s282] sm:$0x1]
        %v335 = vsel %vm332, 0.0, %v334
        %v336 = vlaneseq
        %v337 = vshrl.u32 %v336, 7
        %v338 = vadd.s32 %v337, 8
        %v339 = vlaneseq
        %v340 = vand.u32 %v339, 127
        %vm341 = vcmp.eq.s32.totalorder %v337, 0
        %vm342 = vcmp.eq.s32.totalorder %v338, 0
        %v343 = vrot.slane %v326, 7
        %v344 = vrot.slane %v327, 7
        %vm345 = vcmp.lt.s32.totalorder %v337, 1
        %v346 = vsel %vm345, %v343, %v344
        %v347 = vsel %vm345, %v344, %v343
        %v348 = vperm.slane %v333, 0
        %v349 = vsel %vm341, %v348, %v347
        %v350 = vsel %vm342, %v348, %v346
        %vm351 = vcmp.eq.s32.totalorder %v337, 15
        %vm352 = vcmp.eq.s32.totalorder %v338, 15
        %v353 = vrot.slane %v326, 1
        %v354 = vrot.slane %v327, 1
        %vm355 = vcmp.lt.s32.totalorder %v337, 7
        %v356 = vsel %vm355, %v353, %v354
        %v357 = vsel %vm355, %v354, %v353
        %v358 = vperm.slane %v335, 0
        %v359 = vsel %vm351, %v358, %v356
        %v360 = vsel %vm352, %v358, %v357
        %v361 = vmul.f32 %v326, 2.0
        %v362 = vmul.f32 %v327, 2.0
        %v363 = vadd.f32 %v349, %v361
        %v364 = vadd.f32 %v350, %v362
        %v365 = vadd.f32 %v363, %v359
        %v366 = vadd.f32 %v364, %v360
        %v367 = vsub.f32 %v359, %v349
        %v368 = vsub.f32 %v360, %v350
        %vm369 = vcmp.eq.s32.totalorder %v340, 127
        %370 = vrot.lane.b32.xlu0 %v365, 127
        %v371 = vpop.permute.xlu0 %370
        %372 = vrot.lane.b32.xlu0 %v366, 127
        %v373 = vpop.permute.xlu0 %372
        %v374 = vsel %vm369, 0.0, %v371
        %v375 = vsel %vm369, 0.0, %v373
        %vm376 = vcmp.eq.s32.totalorder %v340, 0
        %377 = vrot.lane.b32.xlu0 %v365, 1
        %v378 = vpop.permute.xlu0 %377
        %379 = vrot.lane.b32.xlu0 %v366, 1
        %v380 = vpop.permute.xlu0 %379
        %v381 = vsel %vm376, 0.0, %v378
        %v382 = vsel %vm376, 0.0, %v380
        %v383 = vsub.f32 %v374, %v381
        %v384 = vsub.f32 %v375, %v382
        %385 = vrot.lane.b32.xlu0 %v367, 1
        %v386 = vpop.permute.xlu0 %385
        %387 = vrot.lane.b32.xlu0 %v368, 1
        %v388 = vpop.permute.xlu0 %387
        %v389 = vsel %vm376, 0.0, %v386
        %v390 = vsel %vm376, 0.0, %v388
        %v391 = vmul.f32 %v367, 2.0
        %v392 = vmul.f32 %v368, 2.0
        %v393 = vadd.f32 %v389, %v391
        %v394 = vadd.f32 %v390, %v392
        %395 = vrot.lane.b32.xlu0 %v367, 127
        %v396 = vpop.permute.xlu0 %395
        %397 = vrot.lane.b32.xlu0 %v368, 127
        %v398 = vpop.permute.xlu0 %397
        %v399 = vsel %vm369, 0.0, %v396
        %v400 = vsel %vm369, 0.0, %v398
        %v401 = vadd.f32 %v393, %v399
        %v402 = vadd.f32 %v394, %v400
        %v403 = vmul.f32 %v383, %v383
        %v404 = vmul.f32 %v384, %v384
        %v405 = vmul.f32 %v401, %v401
        %v406 = vmul.f32 %v402, %v402
        %v407 = vadd.f32 %v403, %v405
        %v408 = vadd.f32 %v404, %v406
        %v409 = vrsqrt.pop %v407
        %v410 = vmul.f32 %v409, %v407
        %v411 = vmul.f32 %v410, %v409
        %v412 = vmul.f32 0.5, %v411
        %v413 = vsub.f32 1.5, %v412
        %v414 = vmul.f32 %v409, %v413
        %v415 = vmul.f32 %v407, %v414
        %vm416 = vcmp.eq.f32.partialorder %v407, inf
        %v417 = vsel %vm416, %v407, %v415
        %vm418 = vcmp.eq.f32.partialorder %v407, 0.0
        %v419 = vand.u32 %v407, 2147483648
        %v420 = vsel %vm418, %v419, %v417
        %v421 = vrsqrt.pop %v408
        %v422 = vmul.f32 %v421, %v408
        %v423 = vmul.f32 %v422, %v421
        %v424 = vmul.f32 0.5, %v423
        %v425 = vsub.f32 1.5, %v424
        %v426 = vmul.f32 %v421, %v425
        %v427 = vmul.f32 %v408, %v426
        %vm428 = vcmp.eq.f32.partialorder %v408, inf
        %v429 = vsel %vm428, %v408, %v427
        %vm430 = vcmp.eq.f32.partialorder %v408, 0.0
        %v431 = vand.u32 %v408, 2147483648
        %v432 = vsel %vm430, %v431, %v429
        %433 = vst [vmem:[%s315] sm:$0xff] %v420
        %434 = vst [vmem:[%s315 + $0x8] sm:$0xff] %v432
        %s435 = sand.u32 %s145, 1
        %s436 = scalar_lea.sflag [#allocation4], %s435
        %s437 = sand.u32 %s145, 1
        %s438 = smul.addr %s437, 16
        %s439 = scalar_lea.vmem [#allocation8], %s438
        // Predicated region
        $region45: #{image_gradient.1} parent=31 // pred_check
          %p440 = pneg %p155
        $region46: #{image_gradient.1} parent=31 // pred_check_branch
          %442 = sbr.rel (%p440) target = $region48
        $region47: #{image_gradient.1} parent=31 // pred_region
          %s443 = smul.u32 2, %s28
          %445 = vsyncadd %s436, 0
          %s446 = smul.addr %s27, 2
          %s447 = sadd.s32 %s443, %s446
          %s448 = smul.addr %s447, 8
          %s449 = scalar_lea.hbm %s3, %s448
          %s450 = sshll.u32 %s439, 4
          %s451 = int_to_ptr.vmem [resolvable:$true] %s450
          %s452 = sshll.u32 %s449, 4
          %s453 = int_to_ptr.hbm [resolvable:$true] %s452
          %458 = dma.vmem_to_hbm [thread:$0]  %s451, 256, %s453, %s436, 128, 128, 8
        $region48: #{image_gradient.1} parent=31 // pred_fallthru
          _
      $region32: #{image_gradient.1} parent=5 // pred_fallthru
        _
      %p459 = scmp.le.s32.totalorder 2, %s18
      // Predicated region
      $region49: #{image_gradient.1} parent=5 // pred_check
        %p460 = pneg %p459
      $region50: #{image_gradient.1} parent=5 // pred_check_branch
        %462 = sbr.rel (%p460) target = $region52
      $region51: #{image_gradient.1} parent=5 // pred_region
        %s463 = ssub.s32 %s18, 2
        // Predicated region
        $region53: #{image_gradient.1} parent=51 // pred_check
          %p464 = pneg %p161
        $region54: #{image_gradient.1} parent=51 // pred_check_branch
          %466 = sbr.rel (%p464) target = $region56
        $region55: #{image_gradient.1} parent=51 // pred_region
          %s467 = sand.u32 %s146, 1
          %s468 = scalar_lea.sflag [#allocation4], %s467
          %s469 = sand.u32 %s146, 1
          %s470 = smul.addr %s469, 16
          %s471 = scalar_lea.vmem [#allocation8], %s470
          %473 = dma.done %s468, 256
        $region56: #{image_gradient.1} parent=51 // pred_fallthru
          _
      $region52: #{image_gradient.1} parent=5 // pred_fallthru
        _
    $region6: #{image_gradient.1} parent=1 // loop_footer
      %s22 = sadd.s32 1, %s18
    $region7: #{image_gradient.1} parent=1 // loop_footer_branch
      %17 = sbr.rel target = $region3
    $region8: #{image_gradient.1} parent=1 // loop_exit
      _
    %474 = vsyncpa [#allocation3], 1
    %s475 = scalar_lea.sflag [#allocation3], 1
    %476 = vsyncpa %s475, 1
    %477 = vsyncpa [#allocation6], 1
    %s478 = scalar_lea.sflag [#allocation6], 1
    %479 = vsyncpa %s478, 1
    %480 = vsyncpa [#allocation4], 1
    %s481 = scalar_lea.sflag [#allocation4], 1
    %482 = vsyncpa %s481, 1

</llo_original>
